<compile_context>
chip_gen: v7x
topology: tpu7x:2x2x1
jax: 0.10.0
libtpu: 0.0.40
codegen_flags: <defaults>
</compile_context>

<pallas_src>
import functools
import math

import jax
import jax.numpy as jnp
from jax.experimental import pallas as pl
from jax.experimental.pallas import tpu as pltpu


_LANE = 128
_VMEM_LIMIT_BYTES = 48 * 1024 * 1024   # explicit scoped-VMEM request (v7x headroom)
_VMEM_BUDGET_BYTES = 40 * 1024 * 1024  # what tile selection budgets against


def _round_up(x, m):
    return ((x + m - 1) // m) * m


def _pick_tile(total, cap):
    """Largest candidate tile <= cap that divides `total` (total % 128 == 0)."""
    for cand in (2048, 1024, 512, 256, 128):
        if cand <= cap and cand <= total and total % cand == 0:
            return cand
    return min(total, _LANE)


# ---------------------------------------------------------------------------
# Kernel A: support = X @ W   (row x column tiled, bf16 operands, f32 acc)
# ---------------------------------------------------------------------------
def _support_kernel(x_ref, w_ref, o_ref):
    o_ref[...] = jnp.dot(
        x_ref[...], w_ref[...], preferred_element_type=jnp.float32
    ).astype(o_ref.dtype)


# ---------------------------------------------------------------------------
# Kernel B: acc += adj[i,k] @ support[:, :side_pad][k]        (over k tiles)
#           out[i] = concat(acc[:, :side_len], support[i, side_len:]) + bias
# ---------------------------------------------------------------------------
def _adj_concat_kernel(*refs, side_len, side_pad, blend_start, has_bias,
                       head_resident, tk, compute_dtype):
    if has_bias:
        adj_ref, head_ref, sup_i_ref, b_ref, o_ref, acc_ref = refs
    else:
        adj_ref, head_ref, sup_i_ref, o_ref, acc_ref = refs
        b_ref = None

    k = pl.program_id(1)

    @pl.when(k == 0)
    def _init():
        acc_ref[...] = jnp.zeros_like(acc_ref)

    # ---- hot loop: adj tile @ support-head tile on the MXU -----------------
    adj_tile = adj_ref[...]
    if adj_tile.dtype != compute_dtype:
        # adj was fed straight from HBM (no pad/cast pre-pass); cast the tile.
        adj_tile = adj_tile.astype(compute_dtype)
    if head_resident:
        start = pl.multiple_of(k * tk, _LANE)
        sup_k = head_ref[pl.ds(start, tk), :]
    else:
        sup_k = head_ref[...]
    acc_ref[...] += jnp.dot(adj_tile, sup_k, preferred_element_type=jnp.float32)

    # ---- finalize (once per row tile, outside the hot k loop) ---------------
    @pl.when(k == pl.num_programs(1) - 1)
    def _finalize():
        acc = acc_ref[...]                                   # (tm, side_pad) f32
        b = b_ref[...] if has_bias else None                 # (1, f_out_pad) f32
        f_out_pad = o_ref.shape[1]

        # columns [0, blend_start): pure adj-matmul result.
        if blend_start > 0:
            hd = acc[:, :blend_start]
            if has_bias:
                hd = hd + b[:, :blend_start]
            o_ref[:, :blend_start] = hd.astype(o_ref.dtype)

        # single boundary 128-lane block [blend_start, side_pad): blend
        # adj-result columns (< side_len) with support pass-through columns.
        if blend_start < side_pad:
            sup_b = sup_i_ref[:, blend_start:side_pad].astype(jnp.float32)
            col = jax.lax.broadcasted_iota(
                jnp.int32, (acc.shape[0], side_pad - blend_start), 1)
            blended = jnp.where(col < (side_len - blend_start),
                                acc[:, blend_start:side_pad], sup_b)
            if has_bias:
                blended = blended + b[:, blend_start:side_pad]
            o_ref[:, blend_start:side_pad] = blended.astype(o_ref.dtype)

        # tail [side_pad, f_out_pad): pass-through from support.
        if side_pad < f_out_pad:
            tail = sup_i_ref[:, side_pad:]
            if has_bias:
                tail = tail.astype(jnp.float32) + b[:, side_pad:]
            o_ref[:, side_pad:] = tail.astype(o_ref.dtype)


def simple_gcn_forward(x, adj, weight1, bias=None, *, compute_dtype=jnp.bfloat16):
    """x: (N, F_in), adj: (N, N) dense, weight1: (F_in, F_out), bias: (F_out,) or None."""
    n, f_in = x.shape
    assert adj.shape == (n, n)
    f_in_w, f_out = weight1.shape
    assert f_in_w == f_in

    out_dtype = x.dtype
    # Torch slicing clamps, so the effective split never exceeds F_out.
    side_len = min(max(f_out // 3, 2), f_out)

    # ---- lane-dense, 128-aligned padded shapes ------------------------------
    f_in_pad = _round_up(f_in, _LANE)
    f_out_pad = _round_up(f_out, _LANE)
    side_pad = min(_round_up(side_len, _LANE), f_out_pad)
    blend_start = side_pad - _LANE if (side_len % _LANE) else side_len
    n_pad = _round_up(n, _LANE)

    cbytes = jnp.dtype(compute_dtype).itemsize
    obytes = jnp.dtype(out_dtype).itemsize
    has_bias = bias is not None

    # ---- kernel-A operands (x/W are the minor terms; pad+cast once) ---------
    x_p = jnp.pad(x.astype(compute_dtype),
                  ((0, n_pad - n), (0, f_in_pad - f_in)))
    w_p = jnp.pad(weight1.astype(compute_dtype),
                  ((0, f_in_pad - f_in), (0, f_out_pad - f_out)))
    if has_bias:
        b_p = jnp.pad(bias.astype(jnp.float32).reshape(1, f_out),
                      ((0, 0), (0, f_out_pad - f_out)))

    # ---- adjacency: no pad/cast HBM pre-pass when N is already aligned ------
    if n_pad == n:
        adj_in = adj                       # streamed as-is, cast per-tile in-kernel
    else:
        adj_in = jnp.pad(adj.astype(compute_dtype),
                         ((0, n_pad - n), (0, n_pad - n)))
    adj_bytes = jnp.dtype(adj_in.dtype).itemsize

    # ---------------------- kernel A: support = X @ W ------------------------
    tm_a = _pick_tile(n_pad, 512)
    tn_a = _pick_tile(f_out_pad, 512)

    def _a_vmem(tm_, tn_):
        return 2 * (tm_ * f_in_pad + f_in_pad * tn_ + tm_ * tn_) * cbytes

    while _a_vmem(tm_a, tn_a) > _VMEM_BUDGET_BYTES and max(tm_a, tn_a) > _LANE:
        if tn_a >= tm_a and tn_a > _LANE:
            tn_a //= 2
        elif tm_a > _LANE:
            tm_a //= 2
    # TODO(synk): also tile the f_in contraction if f_in_pad alone exceeds VMEM.

    support = pl.pallas_call(
        _support_kernel,
        out_shape=jax.ShapeDtypeStruct((n_pad, f_out_pad), compute_dtype),
        grid_spec=pltpu.PrefetchScalarGridSpec(
            num_scalar_prefetch=0,
            grid=(n_pad // tm_a, f_out_pad // tn_a),
            in_specs=[
                pl.BlockSpec((tm_a, f_in_pad), lambda i, j: (i, 0)),
                pl.BlockSpec((f_in_pad, tn_a), lambda i, j: (0, j)),
            ],
            out_specs=pl.BlockSpec((tm_a, tn_a), lambda i, j: (i, j)),
        ),
        compiler_params=pltpu.CompilerParams(
            dimension_semantics=("parallel", "parallel"),
            vmem_limit_bytes=_VMEM_LIMIT_BYTES),
        cost_estimate=pl.CostEstimate(
            flops=2 * n_pad * f_in_pad * f_out_pad,
            transcendentals=0,
            bytes_accessed=(n_pad * f_in_pad * cbytes
                            + (n_pad // tm_a) * f_in_pad * f_out_pad * cbytes
                            + n_pad * f_out_pad * cbytes)),
    )(x_p, w_p)

    # ------- kernel B: adj @ support[:, :side_pad], concat + bias ------------
    tm_cap = 512 if n_pad >= 1024 else max(_LANE, n_pad // 2)
    tm = _pick_tile(n_pad, tm_cap)
    tk = _pick_tile(n_pad, 2048)

    def _b_vmem(tm_, tk_, resident):
        adj_b = 2 * tm_ * tk_ * adj_bytes
        head_b = (2 * n_pad * side_pad * cbytes) if resident \
            else (2 * tk_ * side_pad * cbytes)
        supi_b = 2 * tm_ * f_out_pad * cbytes
        out_b = 2 * tm_ * f_out_pad * obytes
        bias_b = 2 * f_out_pad * 4 if has_bias else 0
        acc_b = tm_ * side_pad * 4
        return adj_b + head_b + supi_b + out_b + bias_b + acc_b

    head_resident = _b_vmem(tm, tk, True) <= _VMEM_BUDGET_BYTES
    while (_b_vmem(tm, tk, head_resident) > _VMEM_BUDGET_BYTES
           and (tk > _LANE or tm > _LANE)):
        if tk > _LANE:
            tk //= 2
        elif tm > _LANE:
            tm //= 2

    kernel_b = functools.partial(
        _adj_concat_kernel, side_len=side_len, side_pad=side_pad,
        blend_start=blend_start, has_bias=has_bias,
        head_resident=head_resident, tk=tk, compute_dtype=compute_dtype)

    if head_resident:
        # Grid-resident contraction operand: DMA'd once, sliced per k in-kernel.
        head_spec = pl.BlockSpec((n_pad, side_pad), lambda i, k: (0, 0))
    else:
        head_spec = pl.BlockSpec((tk, side_pad), lambda i, k: (k, 0))

    in_specs = [
        pl.BlockSpec((tm, tk), lambda i, k: (i, k)),          # adj tile
        head_spec,                                            # support head
        pl.BlockSpec((tm, f_out_pad), lambda i, k: (i, 0)),   # support rows (tail/blend)
    ]
    inputs = [adj_in, support, support]
    if has_bias:
        in_specs.append(pl.BlockSpec((1, f_out_pad), lambda i, k: (0, 0)))
        inputs.append(b_p)

    head_stream_bytes = (n_pad * side_pad * cbytes if head_resident
                         else (n_pad // tm) * n_pad * side_pad * cbytes)
    out_p = pl.pallas_call(
        kernel_b,
        out_shape=jax.ShapeDtypeStruct((n_pad, f_out_pad), out_dtype),
        grid_spec=pltpu.PrefetchScalarGridSpec(
            num_scalar_prefetch=0,
            grid=(n_pad // tm, n_pad // tk),
            in_specs=in_specs,
            out_specs=pl.BlockSpec((tm, f_out_pad), lambda i, k: (i, 0)),
            scratch_shapes=[pltpu.VMEM((tm, side_pad), jnp.float32)],
        ),
        compiler_params=pltpu.CompilerParams(
            dimension_semantics=("parallel", "arbitrary"),
            vmem_limit_bytes=_VMEM_LIMIT_BYTES),
        cost_estimate=pl.CostEstimate(
            flops=2 * n_pad * n_pad * side_pad,
            transcendentals=0,
            bytes_accessed=(n_pad * n_pad * adj_bytes
                            + head_stream_bytes
                            + n_pad * f_out_pad * cbytes
                            + n_pad * f_out_pad * obytes)),
    )(*inputs)

    return out_p[:n, :f_out]


def init_params(key, in_features, out_features, bias=True):
    """Deterministic re-implementation of SimpleGCN.reset_parameters()."""
    stdv = 6.0 / math.sqrt(out_features + in_features)
    stdv *= 0.6
    kw, kb = jax.random.split(key)
    weight1 = jax.random.uniform(
        kw, (in_features, out_features), minval=-stdv, maxval=stdv,
        dtype=jnp.float32)
    b = None
    if bias:
        b = jax.random.uniform(
            kb, (out_features,), minval=-0.1, maxval=0.1, dtype=jnp.float32)
    return weight1, b


def _reference(x, adj, weight1, bias):
    support = x @ weight1
    f_out = weight1.shape[1]
    side_len = min(max(f_out // 3, 2), f_out)
    out = jnp.concatenate(
        [adj @ support[:, :side_len], support[:, side_len:]], axis=1)
    if bias is not None:
        out = out + bias
    return out


def _make_adj(key, n):
    raw = (jax.random.uniform(key, (n, n)) > 0.5).astype(jnp.float32)
    a = raw + jnp.eye(n, dtype=jnp.float32)
    return a / jnp.sum(a, axis=1, keepdims=True)


if __name__ == "__main__":
    key = jax.random.PRNGKey(0)
    keys = jax.random.split(key, 9)

    # --- test 1: bias, F_out < 128 (boundary-blend branch, padded adj) -------
    N, IN_F, OUT_F = 8, 16, 32
    x = jax.random.normal(keys[0], (N, IN_F), dtype=jnp.float32)
    adj = _make_adj(keys[1], N)
    w1, b1 = init_params(keys[2], IN_F, OUT_F, bias=True)
    out = jax.block_until_ready(simple_gcn_forward(x, adj, w1, b1))
    ref = _reference(x, adj, w1, b1)
    assert out.shape == (N, OUT_F)
    assert jnp.allclose(out, ref, atol=3e-2, rtol=3e-2), \
        float(jnp.max(jnp.abs(out - ref)))

    # --- test 2: no bias, F_out > 128 (blend + tail branches) ----------------
    N2, IN2, OUT2 = 16, 24, 200
    x2 = jax.random.normal(keys[3], (N2, IN2), dtype=jnp.float32)
    adj2 = _make_adj(keys[4], N2)
    w2, _ = init_params(keys[5], IN2, OUT2, bias=False)
    out2 = jax.block_until_ready(simple_gcn_forward(x2, adj2, w2, None))
    ref2 = _reference(x2, adj2, w2, None)
    assert out2.shape == (N2, OUT2)
    assert jnp.allclose(out2, ref2, atol=3e-2, rtol=3e-2), \
        float(jnp.max(jnp.abs(out2 - ref2)))

    # --- test 3: N 128-aligned (no adj pre-pass, in-kernel cast, resident
    #     head), side_len multiple of 128 (no blend), column-tiled W ----------
    N3, IN3, OUT3 = 128, 64, 384
    x3 = jax.random.normal(keys[6], (N3, IN3), dtype=jnp.float32)
    adj3 = _make_adj(keys[7], N3)
    w3, b3 = init_params(keys[8], IN3, OUT3, bias=True)
    out3 = jax.block_until_ready(simple_gcn_forward(x3, adj3, w3, b3))
    ref3 = _reference(x3, adj3, w3, b3)
    assert out3.shape == (N3, OUT3)
    assert jnp.allclose(out3, ref3, atol=3e-2, rtol=3e-2), \
        float(jnp.max(jnp.abs(out3 - ref3)))

    print("KERNEL_OK")
</pallas_src>

<mosaic_0001>
module attributes {stable_mosaic.version = 11 : i64} {
  func.func @_support_kernel(%arg0: i32, %arg1: i32, %arg2: memref<128x128xbf16, #tpu.memory_space<vmem>>, %arg3: memref<128x128xbf16, #tpu.memory_space<vmem>>, %arg4: memref<128x128xbf16, #tpu.memory_space<vmem>>) attributes {dimension_semantics = [#tpu.dimension_semantics<parallel>, #tpu.dimension_semantics<parallel>], iteration_bounds = array<i64: 1, 1>, scalar_prefetch = 0 : i64, scratch_operands = 0 : i64, tpu.core_type = #tpu.core_type<tc>, window_params = [{transform_indices = @transform_0, window_bounds = array<i64: 128, 128>}, {transform_indices = @transform_1, window_bounds = array<i64: 128, 128>}, {transform_indices = @transform_2, window_bounds = array<i64: 128, 128>}]} {
    %c0 = arith.constant 0 : index
    %c0_0 = arith.constant 0 : index
    %0 = vector.load %arg2[%c0, %c0_0] : memref<128x128xbf16, #tpu.memory_space<vmem>>, vector<128x128xbf16>
    %c0_1 = arith.constant 0 : index
    %c0_2 = arith.constant 0 : index
    %1 = vector.load %arg3[%c0_1, %c0_2] : memref<128x128xbf16, #tpu.memory_space<vmem>>, vector<128x128xbf16>
    %cst = arith.constant dense<0.000000e+00> : vector<128x128xf32>
    %2 = tpu.matmul %0, %1, %cst {dimension_numbers = #tpu.dot_dimension_numbers<[1], [0], [0], [1], [0, 0, 1, 1], [], []>} : vector<128x128xbf16>, vector<128x128xbf16>, vector<128x128xf32> -> vector<128x128xf32>
    %3 = arith.truncf %2 : vector<128x128xf32> to vector<128x128xbf16>
    %c0_3 = arith.constant 0 : index
    %c0_4 = arith.constant 0 : index
    %4 = vector.load %arg4[%c0_3, %c0_4] : memref<128x128xbf16, #tpu.memory_space<vmem>>, vector<128x128xbf16>
    tpu.vector_store %arg4[%c0_3, %c0_4], %3 {strides = array<i32>} : memref<128x128xbf16, #tpu.memory_space<vmem>>, vector<128x128xbf16>,
    return
  }
  func.func @transform_0(%arg0: i32, %arg1: i32) -> (i32, i32) {
    %c0_i32 = arith.constant 0 : i32
    %c0_i32_0 = arith.constant 0 : i32
    return %arg0, %c0_i32 : i32, i32
  }
  func.func @transform_1(%arg0: i32, %arg1: i32) -> (i32, i32) {
    %c0_i32 = arith.constant 0 : i32
    %c0_i32_0 = arith.constant 0 : i32
    return %c0_i32, %arg1 : i32, i32
  }
  func.func @transform_2(%arg0: i32, %arg1: i32) -> (i32, i32) {
    %c0_i32 = arith.constant 0 : i32
    return %arg0, %arg1 : i32, i32
  }
}

</mosaic_0001>

<llo_original>
// kernel: tpu_custom_call.1
$region0: #{tpu_custom_call.1}
  #allocation0 [shape = 'u32[]', space=smem, size = 0x4, offset = 0x4, fixed_abs, tag = 'smem constant byte address 0x4 - core index']
  #allocation1 [shape = 'u32[144,128]{1,0:T(1,128)}', space=vmem, size = 0x12000, scoped, tag = 'internal scratch']
  %s0 = inlined_call_operand.hbm [shape: bf16[128,128], index: 0, kind: input, shape index: {}]
  %s1 = inlined_call_operand.hbm [shape: bf16[128,128], index: 1, kind: input, shape index: {}]
  %s2 = inlined_call_operand.hbm [shape: bf16[128,128], index: 2, kind: output, shape index: {}]
  %s3 = sld [smem:[#allocation0]]
  $region26: #{tpu_custom_call.1} parent=0
    _
  %s5 = ssub.s32 1, %s3
  %s6 = scalar_select 0, %s5, %s3
  $region1: #{tpu_custom_call.1} parent=0
    #allocation2 [shape = 'u8[32768]{0}', space=vmem, size = 0x8000, scoped, tag = 'input window, operand 0, single buffered']
    #allocation3 [shape = 's32[1]{0}', space=sflag, size = 0x4, scoped, tag = 'scoped memory for tpu_custom_call.1']
    #allocation4 [shape = 's32[1]{0}', space=sflag, size = 0x4, scoped, tag = 'scoped memory for tpu_custom_call.1']
    #allocation5 [shape = 'u8[32768]{0}', space=vmem, size = 0x8000, scoped, tag = 'input window, operand 1, single buffered']
    #allocation6 [shape = 's32[1]{0}', space=sflag, size = 0x4, scoped, tag = 'scoped memory for tpu_custom_call.1']
    #allocation7 [shape = 'u8[32768]{0}', space=vmem, size = 0x8000, scoped, tag = 'output window, operand 0, single buffered']
    %7 = vsyncpa [#allocation3], 0
    %8 = vsyncpa [#allocation6], 0
    %9 = vsyncpa [#allocation4], 0
    // Predicated region
    $region2: #{tpu_custom_call.1} parent=1 // pred_check
      _
    $region3: #{tpu_custom_call.1} parent=1 // pred_check_branch
      %11 = sbr.rel (0) target = $region5
    $region4: #{tpu_custom_call.1} parent=1 // pred_region
      %s13 = ssub.s32 1024, 1024
      %14 = vsyncadd [#allocation3], %s13
      %s15 = sshll.u32 [#allocation2], 4
      %s16 = int_to_ptr.vmem [resolvable:$true] %s15
      %21 = dma.hbm_to_vmem [thread:$0]  %s0, 1024, %s16, [#allocation3], 64, 64, 4
    $region5: #{tpu_custom_call.1} parent=1 // pred_fallthru
      _
    // Predicated region
    $region6: #{tpu_custom_call.1} parent=1 // pred_check
      _
    $region7: #{tpu_custom_call.1} parent=1 // pred_check_branch
      %23 = sbr.rel (0) target = $region9
    $region8: #{tpu_custom_call.1} parent=1 // pred_region
      %s25 = ssub.s32 1024, 1024
      %26 = vsyncadd [#allocation6], %s25
      %s27 = sshll.u32 [#allocation5], 4
      %s28 = int_to_ptr.vmem [resolvable:$true] %s27
      %33 = dma.hbm_to_vmem [thread:$0]  %s1, 1024, %s28, [#allocation6], 64, 64, 4
    $region9: #{tpu_custom_call.1} parent=1 // pred_fallthru
      _
    // Predicated region
    $region10: #{tpu_custom_call.1} parent=1 // pred_check
      _
    $region11: #{tpu_custom_call.1} parent=1 // pred_check_branch
      %35 = sbr.rel (0) target = $region13
    $region12: #{tpu_custom_call.1} parent=1 // pred_region
      %36 = dma.done [#allocation3], 1024
    $region13: #{tpu_custom_call.1} parent=1 // pred_fallthru
      _
    // Predicated region
    $region14: #{tpu_custom_call.1} parent=1 // pred_check
      _
    $region15: #{tpu_custom_call.1} parent=1 // pred_check_branch
      %38 = sbr.rel (0) target = $region17
    $region16: #{tpu_custom_call.1} parent=1 // pred_region
      %39 = dma.done [#allocation6], 1024
    $region17: #{tpu_custom_call.1} parent=1 // pred_fallthru
      _
    %v41 = vld [vmem:[#allocation2] sm:$0xf]
    %v42 = vld [vmem:[#allocation2 + $0x4] sm:$0xf]
    %v43 = vld [vmem:[#allocation2 + $0x8] sm:$0xf]
    %v44 = vld [vmem:[#allocation2 + $0xc] sm:$0xf]
    %v45 = vld [vmem:[#allocation2 + $0x10] sm:$0xf]
    %v46 = vld [vmem:[#allocation2 + $0x14] sm:$0xf]
    %v47 = vld [vmem:[#allocation2 + $0x18] sm:$0xf]
    %v48 = vld [vmem:[#allocation2 + $0x1c] sm:$0xf]
    %v49 = vld [vmem:[#allocation2 + $0x20] sm:$0xf]
    %v50 = vld [vmem:[#allocation2 + $0x24] sm:$0xf]
    %v51 = vld [vmem:[#allocation2 + $0x28] sm:$0xf]
    %v52 = vld [vmem:[#allocation2 + $0x2c] sm:$0xf]
    %v53 = vld [vmem:[#allocation2 + $0x30] sm:$0xf]
    %v54 = vld [vmem:[#allocation2 + $0x34] sm:$0xf]
    %v55 = vld [vmem:[#allocation2 + $0x38] sm:$0xf]
    %v56 = vld [vmem:[#allocation2 + $0x3c] sm:$0xf]
    %v57 = vld [vmem:[#allocation5] sm:$0xf]
    %v58 = vld [vmem:[#allocation5 + $0x4] sm:$0xf]
    %v59 = vld [vmem:[#allocation5 + $0x8] sm:$0xf]
    %v60 = vld [vmem:[#allocation5 + $0xc] sm:$0xf]
    %v61 = vld [vmem:[#allocation5 + $0x10] sm:$0xf]
    %v62 = vld [vmem:[#allocation5 + $0x14] sm:$0xf]
    %v63 = vld [vmem:[#allocation5 + $0x18] sm:$0xf]
    %v64 = vld [vmem:[#allocation5 + $0x1c] sm:$0xf]
    %v65 = vld [vmem:[#allocation5 + $0x20] sm:$0xf]
    %v66 = vld [vmem:[#allocation5 + $0x24] sm:$0xf]
    %v67 = vld [vmem:[#allocation5 + $0x28] sm:$0xf]
    %v68 = vld [vmem:[#allocation5 + $0x2c] sm:$0xf]
    %v69 = vld [vmem:[#allocation5 + $0x30] sm:$0xf]
    %v70 = vld [vmem:[#allocation5 + $0x34] sm:$0xf]
    %v71 = vld [vmem:[#allocation5 + $0x38] sm:$0xf]
    %v72 = vld [vmem:[#allocation5 + $0x3c] sm:$0xf]
    %v89 = vunpack.c.l.b16 %v41
    %v90 = vunpack.c.l.b16 %v42
    %v91 = vunpack.c.l.b16 %v43
    %v92 = vunpack.c.l.b16 %v44
    %v93 = vunpack.c.l.b16 %v45
    %v94 = vunpack.c.l.b16 %v46
    %v95 = vunpack.c.l.b16 %v47
    %v96 = vunpack.c.l.b16 %v48
    %v97 = vunpack.c.l.b16 %v49
    %v98 = vunpack.c.l.b16 %v50
    %v99 = vunpack.c.l.b16 %v51
    %v100 = vunpack.c.l.b16 %v52
    %v101 = vunpack.c.l.b16 %v53
    %v102 = vunpack.c.l.b16 %v54
    %v103 = vunpack.c.l.b16 %v55
    %v104 = vunpack.c.l.b16 %v56
    %v105 = vpack.c.b16 %v90, %v89
    %v106 = vpack.c.b16 %v92, %v91
    %v107 = vpack.c.b16 %v94, %v93
    %v108 = vpack.c.b16 %v96, %v95
    %v109 = vpack.c.b16 %v98, %v97
    %v110 = vpack.c.b16 %v100, %v99
    %v111 = vpack.c.b16 %v102, %v101
    %v112 = vpack.c.b16 %v104, %v103
    %v137 = vunpack.c.l.b16 %v57
    %v138 = vunpack.c.l.b16 %v58
    %v139 = vunpack.c.l.b16 %v59
    %v140 = vunpack.c.l.b16 %v60
    %v141 = vunpack.c.l.b16 %v61
    %v142 = vunpack.c.l.b16 %v62
    %v143 = vunpack.c.l.b16 %v63
    %v144 = vunpack.c.l.b16 %v64
    %v145 = vunpack.c.l.b16 %v65
    %v146 = vunpack.c.l.b16 %v66
    %v147 = vunpack.c.l.b16 %v67
    %v148 = vunpack.c.l.b16 %v68
    %v149 = vunpack.c.l.b16 %v69
    %v150 = vunpack.c.l.b16 %v70
    %v151 = vunpack.c.l.b16 %v71
    %v152 = vunpack.c.l.b16 %v72
    %v153 = vpack.c.b16 %v138, %v137
    %v154 = vpack.c.b16 %v140, %v139
    %v155 = vpack.c.b16 %v142, %v141
    %v156 = vpack.c.b16 %v144, %v143
    %v157 = vpack.c.b16 %v146, %v145
    %v158 = vpack.c.b16 %v148, %v147
    %v159 = vpack.c.b16 %v150, %v149
    %v160 = vpack.c.b16 %v152, %v151
    %169 = vmatprep.subr.bf16.mxu0 0
    %170 = vmatpush1.bf16.msra.mxu0 %v153
    %171 = vmatprep.subr.bf16.mxu0 0
    %172 = vmatpush1.bf16.msra.mxu0 %v154
    %173 = vmatprep.subr.bf16.mxu0 0
    %174 = vmatpush1.bf16.msra.mxu0 %v155
    %175 = vmatprep.subr.bf16.mxu0 0
    %176 = vmatpush1.bf16.msra.mxu0 %v156
    %177 = vmatprep.subr.bf16.mxu0 0
    %178 = vmatpush1.bf16.msra.mxu0 %v157
    %179 = vmatprep.subr.bf16.mxu0 0
    %180 = vmatpush1.bf16.msra.mxu0 %v158
    %181 = vmatprep.subr.bf16.mxu0 0
    %182 = vmatpush1.bf16.msra.mxu0 %v159
    %183 = vmatprep.subr.bf16.mxu0 0
    %184 = vmatpush1.bf16.msra.mxu0 %v160
    %185 = vmatprep.subr.bf16.mxu0 0
    %186 = vmatpush1.bf16.msra.mxu0 0
    %187 = vmatprep.subr.bf16.mxu0 0
    %188 = vmatpush1.bf16.msra.mxu0 0
    %189 = vmatprep.subr.bf16.mxu0 0
    %190 = vmatpush1.bf16.msra.mxu0 0
    %191 = vmatprep.subr.bf16.mxu0 0
    %192 = vmatpush1.bf16.msra.mxu0 0
    %193 = vmatprep.subr.bf16.mxu0 0
    %194 = vmatpush1.bf16.msra.mxu0 0
    %195 = vmatprep.subr.bf16.mxu0 0
    %196 = vmatpush1.bf16.msra.mxu0 0
    %197 = vmatprep.subr.bf16.mxu0 0
    %198 = vmatpush1.bf16.msra.mxu0 0
    %199 = vmatprep.subr.bf16.mxu0 0
    %200 = vmatpush1.bf16.msra.mxu0 0
    %201 = vmatprep.mubr.bf16.mxu0 0
    %202 = vmatmul.mubr.bf16.gmra.mrb[0].mxu0 %v105
    %v203 = vpop.f32.mrb[0].mxu0
    %v204 = vadd.f32 0.0, %v203
    %v205 = vpop.f32.mrb[0].mxu0
    %v206 = vpop.f32.mrb[0].mxu0
    %v207 = vadd.f32 0.0, %v206
    %v208 = vpop.f32.mrb[0].mxu0
    %209 = vmatprep.mubr.bf16.mxu0 0
    %210 = vmatmul.mubr.bf16.gmra.mrb[0].mxu0 %v106
    %v211 = vpop.f32.mrb[0].mxu0
    %v212 = vadd.f32 0.0, %v211
    %v213 = vpop.f32.mrb[0].mxu0
    %v214 = vpop.f32.mrb[0].mxu0
    %v215 = vadd.f32 0.0, %v214
    %v216 = vpop.f32.mrb[0].mxu0
    %217 = vmatprep.mubr.bf16.mxu0 0
    %218 = vmatmul.mubr.bf16.gmra.mrb[0].mxu0 %v107
    %v219 = vpop.f32.mrb[0].mxu0
    %v220 = vadd.f32 0.0, %v219
    %v221 = vpop.f32.mrb[0].mxu0
    %v222 = vpop.f32.mrb[0].mxu0
    %v223 = vadd.f32 0.0, %v222
    %v224 = vpop.f32.mrb[0].mxu0
    %225 = vmatprep.mubr.bf16.mxu0 0
    %226 = vmatmul.mubr.bf16.gmra.mrb[0].mxu0 %v108
    %v227 = vpop.f32.mrb[0].mxu0
    %v228 = vadd.f32 0.0, %v227
    %v229 = vpop.f32.mrb[0].mxu0
    %v230 = vpop.f32.mrb[0].mxu0
    %v231 = vadd.f32 0.0, %v230
    %v232 = vpop.f32.mrb[0].mxu0
    %233 = vmatprep.mubr.bf16.mxu0 0
    %234 = vmatmul.mubr.bf16.gmra.mrb[0].mxu0 %v109
    %v235 = vpop.f32.mrb[0].mxu0
    %v236 = vadd.f32 0.0, %v235
    %v237 = vpop.f32.mrb[0].mxu0
    %v238 = vpop.f32.mrb[0].mxu0
    %v239 = vadd.f32 0.0, %v238
    %v240 = vpop.f32.mrb[0].mxu0
    %241 = vmatprep.mubr.bf16.mxu0 0
    %242 = vmatmul.mubr.bf16.gmra.mrb[0].mxu0 %v110
    %v243 = vpop.f32.mrb[0].mxu0
    %v244 = vadd.f32 0.0, %v243
    %v245 = vpop.f32.mrb[0].mxu0
    %v246 = vpop.f32.mrb[0].mxu0
    %v247 = vadd.f32 0.0, %v246
    %v248 = vpop.f32.mrb[0].mxu0
    %249 = vmatprep.mubr.bf16.mxu0 0
    %250 = vmatmul.mubr.bf16.gmra.mrb[0].mxu0 %v111
    %v251 = vpop.f32.mrb[0].mxu0
    %v252 = vadd.f32 0.0, %v251
    %v253 = vpop.f32.mrb[0].mxu0
    %v254 = vpop.f32.mrb[0].mxu0
    %v255 = vadd.f32 0.0, %v254
    %v256 = vpop.f32.mrb[0].mxu0
    %257 = vmatprep.mubr.bf16.mxu0 0
    %258 = vmatmul.mubr.bf16.gmra.mrb[0].mxu0 %v112
    %v259 = vpop.f32.mrb[0].mxu0
    %v260 = vadd.f32 0.0, %v259
    %v261 = vpop.f32.mrb[0].mxu0
    %v262 = vpop.f32.mrb[0].mxu0
    %v263 = vadd.f32 0.0, %v262
    %v264 = vpop.f32.mrb[0].mxu0
    %265 = vdwg.mxu0
    %v266 = vpack.c.bf16 %v207, %v204
    %v267 = vpack.c.bf16 %v215, %v212
    %v268 = vpack.c.bf16 %v223, %v220
    %v269 = vpack.c.bf16 %v231, %v228
    %v270 = vpack.c.bf16 %v239, %v236
    %v271 = vpack.c.bf16 %v247, %v244
    %v272 = vpack.c.bf16 %v255, %v252
    %v273 = vpack.c.bf16 %v263, %v260
    %v282 = vunpack.c.l.b16 %v266
    %v283 = vunpack.c.h.b16 %v266
    %v284 = vunpack.c.l.b16 %v267
    %v285 = vunpack.c.h.b16 %v267
    %v286 = vunpack.c.l.b16 %v268
    %v287 = vunpack.c.h.b16 %v268
    %v288 = vunpack.c.l.b16 %v269
    %v289 = vunpack.c.h.b16 %v269
    %v290 = vunpack.c.l.b16 %v270
    %v291 = vunpack.c.h.b16 %v270
    %v292 = vunpack.c.l.b16 %v271
    %v293 = vunpack.c.h.b16 %v271
    %v294 = vunpack.c.l.b16 %v272
    %v295 = vunpack.c.h.b16 %v272
    %v296 = vunpack.c.l.b16 %v273
    %v297 = vunpack.c.h.b16 %v273
    %v298 = vpack.c.b16 %v282, %v282
    %v299 = vpack.c.b16 %v283, %v283
    %v300 = vpack.c.b16 %v284, %v284
    %v301 = vpack.c.b16 %v285, %v285
    %v302 = vpack.c.b16 %v286, %v286
    %v303 = vpack.c.b16 %v287, %v287
    %v304 = vpack.c.b16 %v288, %v288
    %v305 = vpack.c.b16 %v289, %v289
    %v306 = vpack.c.b16 %v290, %v290
    %v307 = vpack.c.b16 %v291, %v291
    %v308 = vpack.c.b16 %v292, %v292
    %v309 = vpack.c.b16 %v293, %v293
    %v310 = vpack.c.b16 %v294, %v294
    %v311 = vpack.c.b16 %v295, %v295
    %v312 = vpack.c.b16 %v296, %v296
    %v313 = vpack.c.b16 %v297, %v297
    %330 = vst [vmem:[#allocation7] sm:$0xf] %v298
    %331 = vst [vmem:[#allocation7 + $0x4] sm:$0xf] %v299
    %332 = vst [vmem:[#allocation7 + $0x8] sm:$0xf] %v300
    %333 = vst [vmem:[#allocation7 + $0xc] sm:$0xf] %v301
    %334 = vst [vmem:[#allocation7 + $0x10] sm:$0xf] %v302
    %335 = vst [vmem:[#allocation7 + $0x14] sm:$0xf] %v303
    %336 = vst [vmem:[#allocation7 + $0x18] sm:$0xf] %v304
    %337 = vst [vmem:[#allocation7 + $0x1c] sm:$0xf] %v305
    %338 = vst [vmem:[#allocation7 + $0x20] sm:$0xf] %v306
    %339 = vst [vmem:[#allocation7 + $0x24] sm:$0xf] %v307
    %340 = vst [vmem:[#allocation7 + $0x28] sm:$0xf] %v308
    %341 = vst [vmem:[#allocation7 + $0x2c] sm:$0xf] %v309
    %342 = vst [vmem:[#allocation7 + $0x30] sm:$0xf] %v310
    %343 = vst [vmem:[#allocation7 + $0x34] sm:$0xf] %v311
    %344 = vst [vmem:[#allocation7 + $0x38] sm:$0xf] %v312
    %345 = vst [vmem:[#allocation7 + $0x3c] sm:$0xf] %v313
    // Predicated region
    $region18: #{tpu_custom_call.1} parent=1 // pred_check
      _
    $region19: #{tpu_custom_call.1} parent=1 // pred_check_branch
      %347 = sbr.rel (0) target = $region21
    $region20: #{tpu_custom_call.1} parent=1 // pred_region
      %s349 = ssub.s32 1024, 1024
      %350 = vsyncadd [#allocation4], %s349
      %s351 = sshll.u32 [#allocation7], 4
      %s352 = int_to_ptr.vmem [resolvable:$true] %s351
      %357 = dma.vmem_to_hbm [thread:$0]  %s352, 1024, %s2, [#allocation4], 64, 64, 4
    $region21: #{tpu_custom_call.1} parent=1 // pred_fallthru
      _
    // Predicated region
    $region22: #{tpu_custom_call.1} parent=1 // pred_check
      _
    $region23: #{tpu_custom_call.1} parent=1 // pred_check_branch
      %359 = sbr.rel (0) target = $region25
    $region24: #{tpu_custom_call.1} parent=1 // pred_region
      %360 = dma.done [#allocation4], 1024
    $region25: #{tpu_custom_call.1} parent=1 // pred_fallthru
      _
    %361 = vsyncpa [#allocation3], 1
    %362 = vsyncpa [#allocation6], 1
    %363 = vsyncpa [#allocation4], 1

</llo_original>
